<compile_context>
chip_gen: v7x
topology: tpu7x:2x2x1
jax: 0.10.0
libtpu: 0.0.40
codegen_flags: <defaults>
</compile_context>

<pallas_src>
import functools

import jax
import jax.numpy as jnp
from jax.experimental import pallas as pl
from jax.experimental.pallas import tpu as pltpu


def _round_up(x, m):
    return ((x + m - 1) // m) * m


def _pad_to(a, shape):
    """Zero-pad array `a` up to `shape` (same rank)."""
    out = jnp.zeros(shape, a.dtype)
    return out.at[tuple(slice(0, s) for s in a.shape)].set(a)


def _physical_vmem_bytes():
    """Physical VMEM of the local chip; conservative 64 MiB (v7x) fallback."""
    try:
        info = pltpu.get_tpu_info()
        for attr in ("vmem_capacity_bytes", "vmem_bytes", "vmem_size_bytes"):
            v = getattr(info, attr, None)
            if v:
                return int(v)
    except Exception:
        pass
    return 64 * 1024 * 1024


def _choose_tile_and_vmem(B, IS_pad, H_pad):
    """Pick the batch tile TB (as large as the VMEM budget allows) and the
    scoped-VMEM limit to request from Mosaic."""
    hw_vmem = _physical_vmem_bytes()
    # ~50 MiB pipeline budget on v7x (64 MiB physical), ~100 MiB on v5e/v6e.
    vmem_cap = int(hw_vmem * 0.78)
    bf16, f32 = 2, 4
    # Double-buffered weight footprint of one (block, layer) grid step. Only
    # ONE hidden H_pad x H_pad layer is resident thanks to the layer grid axis.
    w_bytes = 2 * bf16 * (IS_pad * H_pad + H_pad * H_pad + H_pad * IS_pad)
    # 1-row bias tiles pad to 8 sublanes in VMEM.
    b_bytes = 2 * f32 * (3 * 8 * H_pad + 8 * IS_pad)
    fixed = w_bytes + b_bytes
    # Per batch-row bytes: x (dbl buf) + out (dbl buf) + residual + h scratch.
    per_row = f32 * (2 * IS_pad + 2 * 128 + IS_pad + H_pad)
    margin = 4 * 1024 * 1024                       # Mosaic internal scratch
    avail = max(vmem_cap - fixed - margin, 8 * per_row)
    tb_cap = max(8, min(2048, (avail // per_row) // 8 * 8))
    TB = int(min(_round_up(B, 8), tb_cap))
    B_pad = _round_up(B, TB)
    need = fixed + per_row * TB + margin
    vmem_limit = int(min(int(hw_vmem * 0.95), max(need, 16 * 1024 * 1024)))
    return TB, B_pad, vmem_limit


def _nbeats_kernel(x_ref, w0_ref, b0_ref, whl_ref, bhl_ref,
                   wback_ref, bback_ref, wfore_ref, bfore_ref,
                   out_ref, res_ref, h_ref):
    """One (batch-tile, block, layer-stage) grid step of the N-BEATS stack.

    x_ref    : (TB, IS_pad)        f32   flattened input tile (fetched once per bi)
    w0_ref   : (IS_pad, H_pad)     bf16  first FC of this block
    b0_ref   : (1, H_pad)          f32
    whl_ref  : (H_pad, H_pad)      bf16  hidden FC for layer stage-1 of this block
    bhl_ref  : (1, H_pad)          f32
    wback_ref: (H_pad, IS_pad)     bf16  backcast part of last_fc
    bback_ref: (1, IS_pad)         f32
    wfore_ref: (1, H_pad)          f32   forecast row of last_fc
    bfore_ref: (num_blocks,) SMEM  f32   forecast bias per block
    out_ref  : (TB, 128)           f32   lane-dense forecast accumulator (resident)
    res_ref  : (TB, IS_pad)        f32   residual carry        (VMEM scratch)
    h_ref    : (TB, H_pad)         f32   hidden activation carry (VMEM scratch)
    """
    blk = pl.program_id(1)
    stage = pl.program_id(2)
    last_stage = pl.num_programs(2) - 1

    @pl.when(jnp.logical_and(blk == 0, stage == 0))
    def _init():
        res_ref[...] = x_ref[...]
        out_ref[...] = jnp.zeros_like(out_ref)

    # Stage 0: first FC of the block, residual -> hidden.
    @pl.when(stage == 0)
    def _first_fc():
        h = jnp.dot(res_ref[...].astype(jnp.bfloat16), w0_ref[...],
                    preferred_element_type=jnp.float32) + b0_ref[...]
        h_ref[...] = jnp.maximum(h, 0.0)

    # Stages 1..n_layers-1: hidden FCs, one layer's weights streamed per step.
    @pl.when(stage > 0)
    def _hidden_fc():
        h = jnp.dot(h_ref[...].astype(jnp.bfloat16), whl_ref[...],
                    preferred_element_type=jnp.float32) + bhl_ref[...]
        h_ref[...] = jnp.maximum(h, 0.0)

    # Last stage: split theta head (backcast on the MXU, 1-wide forecast on the
    # VPU/XLU), residual update, forecast accumulation into the resident output.
    @pl.when(stage == last_stage)
    def _theta_head():
        h = h_ref[...]
        backcast = jnp.dot(h.astype(jnp.bfloat16), wback_ref[...],
                           preferred_element_type=jnp.float32) + bback_ref[...]
        res_ref[...] = res_ref[...] - backcast
        fore = jnp.sum(h * wfore_ref[...], axis=-1, keepdims=True) + bfore_ref[blk]
        out_ref[...] = out_ref[...] + fore      # broadcast to lane-dense (TB, 128)


def prepare_params(params, *, input_size, num_blocks, n_layers):
    """Pad + cast the parameter stack once (hoisted out of the per-call path).

    nn.Linear weights are stored transposed as (in_features, out_features).
    The theta head (hidden -> input_size + 1) is split into backcast/forecast
    parts so the kernel never slices a lane-misaligned input_size+1 tensor.
    Zero padding of IS/H is closed under the residual recurrence.
    """
    w0, b0, wh, bh, wl, bl = params
    hidden = w0.shape[-1]
    IS_pad = _round_up(input_size, 128)
    H_pad = _round_up(hidden, 128)
    NH = max(n_layers - 1, 1)

    wl_back, wl_fore = wl[:, :, :input_size], wl[:, :, input_size]
    bl_back, bl_fore = bl[:, :input_size], bl[:, input_size]

    w0_p = _pad_to(w0, (num_blocks, IS_pad, H_pad)).astype(jnp.bfloat16)
    b0_p = _pad_to(b0[:, None, :], (num_blocks, 1, H_pad)).astype(jnp.float32)
    wh_p = _pad_to(wh, (num_blocks, NH, H_pad, H_pad)).astype(jnp.bfloat16)
    bh_p = _pad_to(bh[:, :, None, :], (num_blocks, NH, 1, H_pad)).astype(jnp.float32)
    wback_p = _pad_to(wl_back, (num_blocks, H_pad, IS_pad)).astype(jnp.bfloat16)
    bback_p = _pad_to(bl_back[:, None, :], (num_blocks, 1, IS_pad)).astype(jnp.float32)
    wfore_p = _pad_to(wl_fore[:, None, :], (num_blocks, 1, H_pad)).astype(jnp.float32)
    bfore_p = bl_fore.astype(jnp.float32)                       # (num_blocks,) -> SMEM
    return (w0_p, b0_p, wh_p, bh_p, wback_p, bback_p, wfore_p, bfore_p)


def nbeats_forward(x, packed_params, *, n_layers):
    """x: (B, L, C) -> forecast (B, 1). Matches NBeats.forward (generic basis)."""
    B, L, C = x.shape
    input_size = L * C
    w0_p, b0_p, wh_p, bh_p, wback_p, bback_p, wfore_p, bfore_p = packed_params
    num_blocks, IS_pad, H_pad = w0_p.shape
    NH = wh_p.shape[1]

    TB, B_pad, vmem_limit = _choose_tile_and_vmem(B, IS_pad, H_pad)

    x_p = _pad_to(x.reshape(B, input_size).astype(jnp.float32), (B_pad, IS_pad))

    grid = (B_pad // TB, num_blocks, n_layers)

    flops = 2 * B_pad * num_blocks * (IS_pad * H_pad
                                      + (n_layers - 1) * H_pad * H_pad
                                      + H_pad * IS_pad + H_pad)
    weight_bytes_per_block = (2 * (IS_pad * H_pad + NH * H_pad * H_pad + H_pad * IS_pad)
                              + 4 * (2 * H_pad + NH * H_pad + IS_pad))
    bytes_accessed = ((B_pad // TB) * num_blocks * weight_bytes_per_block
                      + 4 * B_pad * IS_pad + 4 * B_pad * 128)

    out_p = pl.pallas_call(
        _nbeats_kernel,
        out_shape=jax.ShapeDtypeStruct((B_pad, 128), jnp.float32),
        grid=grid,
        in_specs=[
            pl.BlockSpec((TB, IS_pad), lambda bi, blk, s: (bi, 0)),               # x
            pl.BlockSpec((None, IS_pad, H_pad), lambda bi, blk, s: (blk, 0, 0)),  # w0
            pl.BlockSpec((None, 1, H_pad), lambda bi, blk, s: (blk, 0, 0)),       # b0
            pl.BlockSpec((None, None, H_pad, H_pad),                              # wh[l]
                         lambda bi, blk, s: (blk, jnp.maximum(s - 1, 0), 0, 0)),
            pl.BlockSpec((None, None, 1, H_pad),                                  # bh[l]
                         lambda bi, blk, s: (blk, jnp.maximum(s - 1, 0), 0, 0)),
            pl.BlockSpec((None, H_pad, IS_pad), lambda bi, blk, s: (blk, 0, 0)),  # wl_back
            pl.BlockSpec((None, 1, IS_pad), lambda bi, blk, s: (blk, 0, 0)),      # bl_back
            pl.BlockSpec((None, 1, H_pad), lambda bi, blk, s: (blk, 0, 0)),       # wl_fore
            pl.BlockSpec(memory_space=pltpu.MemorySpace.SMEM),                    # bl_fore
        ],
        out_specs=pl.BlockSpec((TB, 128), lambda bi, blk, s: (bi, 0)),
        scratch_shapes=[pltpu.VMEM((TB, IS_pad), jnp.float32),   # residual carry
                        pltpu.VMEM((TB, H_pad), jnp.float32)],   # hidden activation
        compiler_params=pltpu.CompilerParams(
            dimension_semantics=("parallel", "arbitrary", "arbitrary"),
            vmem_limit_bytes=vmem_limit),
        cost_estimate=pl.CostEstimate(flops=int(flops), transcendentals=0,
                                      bytes_accessed=int(bytes_accessed)),
    )(x_p, w0_p, b0_p, wh_p, bh_p, wback_p, bback_p, wfore_p, bfore_p)

    return out_p[:B, :1]


def nbeats_reference(x, params, *, num_blocks, n_layers):
    """Pure-JAX reference matching the PyTorch forward, using the same precision
    policy as the kernel (bf16 MXU operands, f32 accumulation, f32 residual)."""
    B, L, C = x.shape
    input_size = L * C
    w0, b0, wh, bh, wl, bl = params
    bf16 = jnp.bfloat16
    residual = x.reshape(B, input_size).astype(jnp.float32)
    forecast = jnp.zeros((B, 1), jnp.float32)
    for blk in range(num_blocks):
        h = jnp.dot(residual.astype(bf16), w0[blk].astype(bf16),
                    preferred_element_type=jnp.float32) + b0[blk]
        h = jnp.maximum(h, 0.0)
        for l in range(n_layers - 1):
            h = jnp.dot(h.astype(bf16), wh[blk, l].astype(bf16),
                        preferred_element_type=jnp.float32) + bh[blk, l]
            h = jnp.maximum(h, 0.0)
        backcast = jnp.dot(h.astype(bf16), wl[blk, :, :input_size].astype(bf16),
                           preferred_element_type=jnp.float32) + bl[blk, :input_size]
        fore = jnp.sum(h * wl[blk, :, input_size][None, :], axis=-1,
                       keepdims=True) + bl[blk, input_size]
        residual = residual - backcast
        forecast = forecast + fore
    return forecast


def init_params(key, *, input_size, hidden_dim, num_blocks, n_layers):
    """Deterministic synthetic parameters (nn.Linear weights stored transposed
    as (in_features, out_features) so y = x @ W + b)."""
    theta_dim = input_size + 1
    ks = jax.random.split(key, 6)
    scale = 0.1
    w0 = scale * jax.random.normal(ks[0], (num_blocks, input_size, hidden_dim),
                                   jnp.float32)
    b0 = scale * jax.random.normal(ks[1], (num_blocks, hidden_dim), jnp.float32)
    wh = scale * jax.random.normal(
        ks[2], (num_blocks, n_layers - 1, hidden_dim, hidden_dim), jnp.float32)
    bh = scale * jax.random.normal(
        ks[3], (num_blocks, n_layers - 1, hidden_dim), jnp.float32)
    wl = scale * jax.random.normal(ks[4], (num_blocks, hidden_dim, theta_dim),
                                   jnp.float32)
    bl = scale * jax.random.normal(ks[5], (num_blocks, theta_dim), jnp.float32)
    return (w0, b0, wh, bh, wl, bl)


if __name__ == "__main__":
    # Small shapes consistent with the module: x (B, L, input_dim) -> out (B, 1)
    B, L, C = 4, 16, 1
    hidden_dim = 32
    num_blocks = 3
    n_layers = 3
    input_size = L * C

    key = jax.random.PRNGKey(0)
    kx, kp = jax.random.split(key)
    x = jax.random.normal(kx, (B, L, C), jnp.float32)
    params = init_params(kp, input_size=input_size, hidden_dim=hidden_dim,
                         num_blocks=num_blocks, n_layers=n_layers)

    # Pad / cast the parameter stack once (hoisted out of the per-call path).
    packed = prepare_params(params, input_size=input_size,
                            num_blocks=num_blocks, n_layers=n_layers)
    packed = jax.tree_util.tree_map(jax.block_until_ready, packed)

    forward = jax.jit(functools.partial(nbeats_forward, n_layers=n_layers))
    out = jax.block_until_ready(forward(x, packed))

    ref = nbeats_reference(x, params, num_blocks=num_blocks, n_layers=n_layers)
    assert out.shape == (B, 1), out.shape
    assert jnp.allclose(out, ref, rtol=5e-3, atol=5e-3), (out, ref)
    print("KERNEL_OK")
</pallas_src>

<mosaic_0001>
module attributes {stable_mosaic.version = 11 : i64} {
  func.func @_nbeats_kernel(%arg0: i32, %arg1: i32, %arg2: i32, %arg3: memref<8x128xf32, #tpu.memory_space<vmem>>, %arg4: memref<1x128x128xbf16, #tpu.memory_space<vmem>>, %arg5: memref<1x1x128xf32, #tpu.memory_space<vmem>>, %arg6: memref<1x1x128x128xbf16, #tpu.memory_space<vmem>>, %arg7: memref<1x1x1x128xf32, #tpu.memory_space<vmem>>, %arg8: memref<1x128x128xbf16, #tpu.memory_space<vmem>>, %arg9: memref<1x1x128xf32, #tpu.memory_space<vmem>>, %arg10: memref<1x1x128xf32, #tpu.memory_space<vmem>>, %arg11: memref<3xf32, #tpu.memory_space<smem>>, %arg12: memref<8x128xf32, #tpu.memory_space<vmem>>, %arg13: memref<8x128xf32, #tpu.memory_space<vmem>>, %arg14: memref<8x128xf32, #tpu.memory_space<vmem>>) attributes {dimension_semantics = [#tpu.dimension_semantics<parallel>, #tpu.dimension_semantics<arbitrary>, #tpu.dimension_semantics<arbitrary>], iteration_bounds = array<i64: 1, 3, 3>, scalar_prefetch = 0 : i64, scratch_operands = 2 : i64, tpu.core_type = #tpu.core_type<tc>, window_params = [{transform_indices = @transform_0, window_bounds = array<i64: 8, 128>}, {transform_indices = @transform_1, window_bounds = array<i64: 1, 128, 128>}, {transform_indices = @transform_2, window_bounds = array<i64: 1, 1, 128>}, {transform_indices = @transform_3, window_bounds = array<i64: 1, 1, 128, 128>}, {transform_indices = @transform_4, window_bounds = array<i64: 1, 1, 1, 128>}, {transform_indices = @transform_5, window_bounds = array<i64: 1, 128, 128>}, {transform_indices = @transform_6, window_bounds = array<i64: 1, 1, 128>}, {transform_indices = @transform_7, window_bounds = array<i64: 1, 1, 128>}, {transform_indices = @transform_8, window_bounds = array<i64: 3>}, {transform_indices = @transform_9, window_bounds = array<i64: 8, 128>}]} {
    %c0_i32 = arith.constant 0 : i32
    %0 = arith.cmpi eq, %arg1, %c0_i32 : i32
    %c0_i32_0 = arith.constant 0 : i32
    %1 = arith.cmpi eq, %arg2, %c0_i32_0 : i32
    %2 = arith.andi %0, %1 : i1
    %3 = arith.extui %2 : i1 to i32
    %c0_i32_1 = arith.constant 0 : i32
    %4 = arith.cmpi ne, %3, %c0_i32_1 : i32
    scf.if %4 {
      %c0 = arith.constant 0 : index
      %c0_7 = arith.constant 0 : index
      %14 = vector.load %arg3[%c0, %c0_7] : memref<8x128xf32, #tpu.memory_space<vmem>>, vector<8x128xf32>
      %c0_8 = arith.constant 0 : index
      %c0_9 = arith.constant 0 : index
      %15 = vector.load %arg13[%c0_8, %c0_9] : memref<8x128xf32, #tpu.memory_space<vmem>>, vector<8x128xf32>
      tpu.vector_store %arg13[%c0_8, %c0_9], %14 {strides = array<i32>} : memref<8x128xf32, #tpu.memory_space<vmem>>, vector<8x128xf32>,
      %cst = arith.constant 0.000000e+00 : f32
      %16 = vector.broadcast %cst : f32 to vector<8x128xf32>
      %c0_10 = arith.constant 0 : index
      %c0_11 = arith.constant 0 : index
      %17 = vector.load %arg12[%c0_10, %c0_11] : memref<8x128xf32, #tpu.memory_space<vmem>>, vector<8x128xf32>
      tpu.vector_store %arg12[%c0_10, %c0_11], %16 {strides = array<i32>} : memref<8x128xf32, #tpu.memory_space<vmem>>, vector<8x128xf32>,
    } else {
    }
    %c0_i32_2 = arith.constant 0 : i32
    %5 = arith.cmpi eq, %arg2, %c0_i32_2 : i32
    %6 = arith.extui %5 : i1 to i32
    %c0_i32_3 = arith.constant 0 : i32
    %7 = arith.cmpi ne, %6, %c0_i32_3 : i32
    scf.if %7 {
      %c0 = arith.constant 0 : index
      %c0_7 = arith.constant 0 : index
      %14 = vector.load %arg13[%c0, %c0_7] : memref<8x128xf32, #tpu.memory_space<vmem>>, vector<8x128xf32>
      %15 = arith.truncf %14 : vector<8x128xf32> to vector<8x128xbf16>
      %c0_8 = arith.constant 0 : index
      %c0_9 = arith.constant 0 : index
      %c0_10 = arith.constant 0 : index
      %16 = vector.load %arg4[%c0_8, %c0_9, %c0_10] : memref<1x128x128xbf16, #tpu.memory_space<vmem>>, vector<1x128x128xbf16>
      %17 = vector.shape_cast %16 : vector<1x128x128xbf16> to vector<128x128xbf16>
      %cst = arith.constant dense<0.000000e+00> : vector<8x128xf32>
      %18 = tpu.matmul %15, %17, %cst {dimension_numbers = #tpu.dot_dimension_numbers<[1], [0], [0], [1], [0, 0, 1, 1], [], []>} : vector<8x128xbf16>, vector<128x128xbf16>, vector<8x128xf32> -> vector<8x128xf32>
      %c0_11 = arith.constant 0 : index
      %c0_12 = arith.constant 0 : index
      %c0_13 = arith.constant 0 : index
      %19 = vector.load %arg5[%c0_11, %c0_12, %c0_13] : memref<1x1x128xf32, #tpu.memory_space<vmem>>, vector<1x1x128xf32>
      %20 = vector.shape_cast %19 : vector<1x1x128xf32> to vector<1x128xf32>
      %21 = vector.broadcast %20 : vector<1x128xf32> to vector<8x128xf32>
      %22 = arith.addf %18, %21 : vector<8x128xf32>
      %cst_14 = arith.constant 0.000000e+00 : f32
      %23 = vector.broadcast %cst_14 : f32 to vector<8x128xf32>
      %24 = arith.maximumf %22, %23 : vector<8x128xf32>
      %c0_15 = arith.constant 0 : index
      %c0_16 = arith.constant 0 : index
      %25 = vector.load %arg14[%c0_15, %c0_16] : memref<8x128xf32, #tpu.memory_space<vmem>>, vector<8x128xf32>
      tpu.vector_store %arg14[%c0_15, %c0_16], %24 {strides = array<i32>} : memref<8x128xf32, #tpu.memory_space<vmem>>, vector<8x128xf32>,
    } else {
    }
    %c0_i32_4 = arith.constant 0 : i32
    %8 = arith.cmpi sgt, %arg2, %c0_i32_4 : i32
    %9 = arith.extui %8 : i1 to i32
    %c0_i32_5 = arith.constant 0 : i32
    %10 = arith.cmpi ne, %9, %c0_i32_5 : i32
    scf.if %10 {
      %c0 = arith.constant 0 : index
      %c0_7 = arith.constant 0 : index
      %14 = vector.load %arg14[%c0, %c0_7] : memref<8x128xf32, #tpu.memory_space<vmem>>, vector<8x128xf32>
      %15 = arith.truncf %14 : vector<8x128xf32> to vector<8x128xbf16>
      %c0_8 = arith.constant 0 : index
      %c0_9 = arith.constant 0 : index
      %c0_10 = arith.constant 0 : index
      %c0_11 = arith.constant 0 : index
      %16 = vector.load %arg6[%c0_8, %c0_9, %c0_10, %c0_11] : memref<1x1x128x128xbf16, #tpu.memory_space<vmem>>, vector<1x1x128x128xbf16>
      %17 = vector.shape_cast %16 : vector<1x1x128x128xbf16> to vector<128x128xbf16>
      %cst = arith.constant dense<0.000000e+00> : vector<8x128xf32>
      %18 = tpu.matmul %15, %17, %cst {dimension_numbers = #tpu.dot_dimension_numbers<[1], [0], [0], [1], [0, 0, 1, 1], [], []>} : vector<8x128xbf16>, vector<128x128xbf16>, vector<8x128xf32> -> vector<8x128xf32>
      %c0_12 = arith.constant 0 : index
      %c0_13 = arith.constant 0 : index
      %c0_14 = arith.constant 0 : index
      %c0_15 = arith.constant 0 : index
      %19 = vector.load %arg7[%c0_12, %c0_13, %c0_14, %c0_15] : memref<1x1x1x128xf32, #tpu.memory_space<vmem>>, vector<1x1x1x128xf32>
      %20 = vector.shape_cast %19 : vector<1x1x1x128xf32> to vector<1x128xf32>
      %21 = vector.broadcast %20 : vector<1x128xf32> to vector<8x128xf32>
      %22 = arith.addf %18, %21 : vector<8x128xf32>
      %cst_16 = arith.constant 0.000000e+00 : f32
      %23 = vector.broadcast %cst_16 : f32 to vector<8x128xf32>
      %24 = arith.maximumf %22, %23 : vector<8x128xf32>
      %c0_17 = arith.constant 0 : index
      %c0_18 = arith.constant 0 : index
      %25 = vector.load %arg14[%c0_17, %c0_18] : memref<8x128xf32, #tpu.memory_space<vmem>>, vector<8x128xf32>
      tpu.vector_store %arg14[%c0_17, %c0_18], %24 {strides = array<i32>} : memref<8x128xf32, #tpu.memory_space<vmem>>, vector<8x128xf32>,
    } else {
    }
    %c2_i32 = arith.constant 2 : i32
    %11 = arith.cmpi eq, %arg2, %c2_i32 : i32
    %12 = arith.extui %11 : i1 to i32
    %c0_i32_6 = arith.constant 0 : i32
    %13 = arith.cmpi ne, %12, %c0_i32_6 : i32
    scf.if %13 {
      %c0 = arith.constant 0 : index
      %c0_7 = arith.constant 0 : index
      %14 = vector.load %arg14[%c0, %c0_7] : memref<8x128xf32, #tpu.memory_space<vmem>>, vector<8x128xf32>
      %15 = arith.truncf %14 : vector<8x128xf32> to vector<8x128xbf16>
      %c0_8 = arith.constant 0 : index
      %c0_9 = arith.constant 0 : index
      %c0_10 = arith.constant 0 : index
      %16 = vector.load %arg8[%c0_8, %c0_9, %c0_10] : memref<1x128x128xbf16, #tpu.memory_space<vmem>>, vector<1x128x128xbf16>
      %17 = vector.shape_cast %16 : vector<1x128x128xbf16> to vector<128x128xbf16>
      %cst = arith.constant dense<0.000000e+00> : vector<8x128xf32>
      %18 = tpu.matmul %15, %17, %cst {dimension_numbers = #tpu.dot_dimension_numbers<[1], [0], [0], [1], [0, 0, 1, 1], [], []>} : vector<8x128xbf16>, vector<128x128xbf16>, vector<8x128xf32> -> vector<8x128xf32>
      %c0_11 = arith.constant 0 : index
      %c0_12 = arith.constant 0 : index
      %c0_13 = arith.constant 0 : index
      %19 = vector.load %arg9[%c0_11, %c0_12, %c0_13] : memref<1x1x128xf32, #tpu.memory_space<vmem>>, vector<1x1x128xf32>
      %20 = vector.shape_cast %19 : vector<1x1x128xf32> to vector<1x128xf32>
      %21 = vector.broadcast %20 : vector<1x128xf32> to vector<8x128xf32>
      %22 = arith.addf %18, %21 : vector<8x128xf32>
      %c0_14 = arith.constant 0 : index
      %c0_15 = arith.constant 0 : index
      %23 = vector.load %arg13[%c0_14, %c0_15] : memref<8x128xf32, #tpu.memory_space<vmem>>, vector<8x128xf32>
      %24 = arith.subf %23, %22 : vector<8x128xf32>
      %c0_16 = arith.constant 0 : index
      %c0_17 = arith.constant 0 : index
      %25 = vector.load %arg13[%c0_16, %c0_17] : memref<8x128xf32, #tpu.memory_space<vmem>>, vector<8x128xf32>
      tpu.vector_store %arg13[%c0_16, %c0_17], %24 {strides = array<i32>} : memref<8x128xf32, #tpu.memory_space<vmem>>, vector<8x128xf32>,
      %c0_18 = arith.constant 0 : index
      %c0_19 = arith.constant 0 : index
      %c0_20 = arith.constant 0 : index
      %26 = vector.load %arg10[%c0_18, %c0_19, %c0_20] : memref<1x1x128xf32, #tpu.memory_space<vmem>>, vector<1x1x128xf32>
      %27 = vector.shape_cast %26 : vector<1x1x128xf32> to vector<1x128xf32>
      %28 = vector.broadcast %27 : vector<1x128xf32> to vector<8x128xf32>
      %29 = arith.mulf %14, %28 : vector<8x128xf32>
      %cst_21 = arith.constant dense<0.000000e+00> : vector<8xf32>
      %30 = vector.multi_reduction <add>, %29, %cst_21 [1] : vector<8x128xf32> to vector<8xf32>
      %31 = vector.shape_cast %30 : vector<8xf32> to vector<8x1xf32>
      %32 = arith.index_cast %arg1 : i32 to index
      %33 = memref.load %arg11[%32] : memref<3xf32, #tpu.memory_space<smem>>
      %34 = vector.broadcast %33 : f32 to vector<8x1xf32>
      %35 = arith.addf %31, %34 : vector<8x1xf32>
      %c0_22 = arith.constant 0 : index
      %c0_23 = arith.constant 0 : index
      %36 = vector.load %arg12[%c0_22, %c0_23] : memref<8x128xf32, #tpu.memory_space<vmem>>, vector<8x128xf32>
      %37 = vector.broadcast %35 : vector<8x1xf32> to vector<8x128xf32>
      %38 = arith.addf %36, %37 : vector<8x128xf32>
      %c0_24 = arith.constant 0 : index
      %c0_25 = arith.constant 0 : index
      %39 = vector.load %arg12[%c0_24, %c0_25] : memref<8x128xf32, #tpu.memory_space<vmem>>, vector<8x128xf32>
      tpu.vector_store %arg12[%c0_24, %c0_25], %38 {strides = array<i32>} : memref<8x128xf32, #tpu.memory_space<vmem>>, vector<8x128xf32>,
    } else {
    }
    return
  }
  func.func @transform_0(%arg0: i32, %arg1: i32, %arg2: i32) -> (i32, i32) {
    %c0_i32 = arith.constant 0 : i32
    %c0_i32_0 = arith.constant 0 : i32
    return %arg0, %c0_i32 : i32, i32
  }
  func.func @transform_1(%arg0: i32, %arg1: i32, %arg2: i32) -> (i32, i32, i32) {
    %c0_i32 = arith.constant 0 : i32
    %c0_i32_0 = arith.constant 0 : i32
    %c0_i32_1 = arith.constant 0 : i32
    return %arg1, %c0_i32, %c0_i32_0 : i32, i32, i32
  }
  func.func @transform_2(%arg0: i32, %arg1: i32, %arg2: i32) -> (i32, i32, i32) {
    %c0_i32 = arith.constant 0 : i32
    %c0_i32_0 = arith.constant 0 : i32
    %c0_i32_1 = arith.constant 0 : i32
    return %arg1, %c0_i32, %c0_i32_0 : i32, i32, i32
  }
  func.func @transform_3(%arg0: i32, %arg1: i32, %arg2: i32) -> (i32, i32, i32, i32) {
    %c1_i32 = arith.constant 1 : i32
    %0 = arith.subi %arg2, %c1_i32 : i32
    %c0_i32 = arith.constant 0 : i32
    %1 = arith.maxsi %0, %c0_i32 : i32
    %c0_i32_0 = arith.constant 0 : i32
    %c0_i32_1 = arith.constant 0 : i32
    %c0_i32_2 = arith.constant 0 : i32
    return %arg1, %1, %c0_i32_0, %c0_i32_1 : i32, i32, i32, i32
  }
  func.func @transform_4(%arg0: i32, %arg1: i32, %arg2: i32) -> (i32, i32, i32, i32) {
    %c1_i32 = arith.constant 1 : i32
    %0 = arith.subi %arg2, %c1_i32 : i32
    %c0_i32 = arith.constant 0 : i32
    %1 = arith.maxsi %0, %c0_i32 : i32
    %c0_i32_0 = arith.constant 0 : i32
    %c0_i32_1 = arith.constant 0 : i32
    %c0_i32_2 = arith.constant 0 : i32
    return %arg1, %1, %c0_i32_0, %c0_i32_1 : i32, i32, i32, i32
  }
  func.func @transform_5(%arg0: i32, %arg1: i32, %arg2: i32) -> (i32, i32, i32) {
    %c0_i32 = arith.constant 0 : i32
    %c0_i32_0 = arith.constant 0 : i32
    %c0_i32_1 = arith.constant 0 : i32
    return %arg1, %c0_i32, %c0_i32_0 : i32, i32, i32
  }
  func.func @transform_6(%arg0: i32, %arg1: i32, %arg2: i32) -> (i32, i32, i32) {
    %c0_i32 = arith.constant 0 : i32
    %c0_i32_0 = arith.constant 0 : i32
    %c0_i32_1 = arith.constant 0 : i32
    return %arg1, %c0_i32, %c0_i32_0 : i32, i32, i32
  }
  func.func @transform_7(%arg0: i32, %arg1: i32, %arg2: i32) -> (i32, i32, i32) {
    %c0_i32 = arith.constant 0 : i32
    %c0_i32_0 = arith.constant 0 : i32
    %c0_i32_1 = arith.constant 0 : i32
    return %arg1, %c0_i32, %c0_i32_0 : i32, i32, i32
  }
  func.func @transform_8(%arg0: i32, %arg1: i32, %arg2: i32) -> i32 {
    %c0_i32 = arith.constant 0 : i32
    %c0_i32_0 = arith.constant 0 : i32
    return %c0_i32 : i32
  }
  func.func @transform_9(%arg0: i32, %arg1: i32, %arg2: i32) -> (i32, i32) {
    %c0_i32 = arith.constant 0 : i32
    %c0_i32_0 = arith.constant 0 : i32
    return %arg0, %c0_i32 : i32, i32
  }
}

</mosaic_0001>

<llo_original>
// kernel: nbeats_forward.1
$region0: #{nbeats_forward.1}
  #allocation0 [shape = 'u32[]', space=smem, size = 0x4, offset = 0x4, fixed_abs, tag = 'smem constant byte address 0x4 - core index']
  #allocation1 [shape = 'u32[144,128]{1,0:T(1,128)}', space=vmem, size = 0x12000, scoped, tag = 'internal scratch']
  #allocation2 [shape = 'f32[8,128]{1,0:T(8,128)}', space=vmem, size = 0x1000, scoped, tag = 'scratch operand']
  #allocation3 [shape = 'f32[8,128]{1,0:T(8,128)}', space=vmem, size = 0x1000, scoped, tag = 'scratch operand']
  %s0 = inlined_call_operand.vmem [shape: f32[8,128], index: 0, kind: input, shape index: {}]
  %s1 = inlined_call_operand.hbm [shape: bf16[3,128,128], index: 1, kind: input, shape index: {}]
  %s2 = inlined_call_operand.vmem [shape: f32[3,1,128], index: 2, kind: input, shape index: {}]
  %s3 = inlined_call_operand.hbm [shape: bf16[3,2,128,128], index: 3, kind: input, shape index: {}]
  %s4 = inlined_call_operand.vmem [shape: f32[3,2,1,128], index: 4, kind: input, shape index: {}]
  %s5 = inlined_call_operand.hbm [shape: bf16[3,128,128], index: 5, kind: input, shape index: {}]
  %s6 = inlined_call_operand.vmem [shape: f32[3,1,128], index: 6, kind: input, shape index: {}]
  %s7 = inlined_call_operand.vmem [shape: f32[3,1,128], index: 7, kind: input, shape index: {}]
  %s8 = inlined_call_operand.vmem [shape: f32[3], index: 8, kind: input, shape index: {}]
  %s9 = inlined_call_operand.vmem [shape: f32[8,128], index: 9, kind: output, shape index: {}]
  %s10 = sld [smem:[#allocation0]]
  $region101: #{nbeats_forward.1} parent=0
    _
  %s12 = ssub.s32 1, %s10
  %s13 = scalar_select 0, %s12, %s10
  $region1: #{nbeats_forward.1} parent=0
    #allocation4 [shape = 'u8[65536]{0}', space=vmem, size = 0x10000, scoped, tag = 'input window, operand 1']
    #allocation5 [shape = 's32[2]{0}', space=sflag, size = 0x8, scoped, tag = 'scoped memory for nbeats_forward.1']
    #allocation6 [shape = 's32[2]{0}', space=sflag, size = 0x8, scoped, tag = 'scoped memory for nbeats_forward.1']
    #allocation7 [shape = 'u8[65536]{0}', space=vmem, size = 0x10000, scoped, tag = 'input window, operand 3']
    #allocation8 [shape = 's32[2]{0}', space=sflag, size = 0x8, scoped, tag = 'scoped memory for nbeats_forward.1']
    #allocation9 [shape = 'u8[65536]{0}', space=vmem, size = 0x10000, scoped, tag = 'input window, operand 5']
    #allocation10 [shape = 'u8[512]{0}', space=smem, size = 0x200, scoped, tag = 'input window, operand 8, single buffered']
    %14 = vsyncpa [#allocation5], 0
    %s15 = scalar_lea.sflag [#allocation5], 1
    %16 = vsyncpa %s15, 0
    %17 = vsyncpa [#allocation8], 0
    %s18 = scalar_lea.sflag [#allocation8], 1
    %19 = vsyncpa %s18, 0
    %20 = vsyncpa [#allocation6], 0
    loop: start=0, step=1, limit=11
    $region2: #{nbeats_forward.1} parent=1 // loop_pre_header
      _
    $region3: #{nbeats_forward.1} parent=1 // loop_header
      %s22 = sphi 0, %s26
      %p23 = scmp.ge.s32.totalorder %s22, 11
      %s29 = sphi 0, %s48
      %s30 = sphi 0, %s44
      %s31 = sphi 0, %s40
      %s32 = sphi 0, %s29
      %s33 = sphi 0, %s30
      %s34 = sphi 0, %s31
      %s35 = sphi 0, %s32
      %s36 = sphi 0, %s33
      %s37 = sphi 0, %s34
      %s51 = sphi 0, %s53
      %s54 = sphi 0, %s51
      %s55 = sphi 0, %s54
      %s71 = sphi 0, %s55
      %s77 = sphi 0, %s79
      %s80 = sphi 0, %s77
      %s81 = sphi 0, %s80
      %s97 = sphi 0, %s81
      %s103 = sphi 0, %s105
      %s106 = sphi 0, %s103
      %s107 = sphi 0, %s106
      %s123 = sphi 0, %s107
      %s137 = sphi 0, %s139
      %s140 = sphi 0, %s137
      %s141 = sphi 0, %s140
      %s157 = sphi 0, %s141
      %s171 = sphi 0, %s173
      %s174 = sphi 0, %s171
      %s175 = sphi 0, %s174
      %s191 = sphi 0, %s175
      %s197 = sphi 0, %s199
      %s200 = sphi 0, %s197
      %s201 = sphi 0, %s200
      %s217 = sphi 0, %s201
      %s223 = sphi 0, %s225
      %s226 = sphi 0, %s223
      %s227 = sphi 0, %s226
      %s243 = sphi 0, %s227
      %s249 = sphi 0, %s251
      %s252 = sphi 0, %s249
      %s253 = sphi 0, %s252
      %s269 = sphi 0, %s253
      %s273 = sphi 0, %s273
      %s275 = sphi 0, %s273
      %s276 = sphi 0, %s275
      %s290 = sphi 0, %s276
      %s296 = sphi 0, %s298
      %s299 = sphi 0, %s296
      %s300 = sphi 0, %s299
      %s316 = sphi 0, %s300
    $region4: #{nbeats_forward.1} parent=1 // loop_header_branch
      %25 = sbr.rel (%p23) target = $region8
    $region5: #{nbeats_forward.1} parent=1 // loop_body
      %s27 = ssub.s32 %s22, 1
      %s28 = ssub.s32 %s22, 2
      %s38 = sadd.s32 1, %s31
      %p39 = scmp.ge.s32.totalorder %s38, 3
      %s40 = scalar_select %p39, 0, %s38
      %s41 = sadd.s32 1, %s30
      %s42 = scalar_select %p39, %s41, %s30
      %p43 = scmp.ge.s32.totalorder %s42, 3
      %s44 = scalar_select %p43, 0, %s42
      %s45 = sadd.s32 1, %s29
      %s46 = scalar_select %p43, %s45, %s29
      %p47 = scmp.ge.s32.totalorder %s46, 1
      %s48 = scalar_select %p47, 0, %s46
      %s49 = ssub.s32 %s29, %s48
      %p50 = scmp.eq.s32.totalorder %s49, 0
      %s52 = sadd.s32 %s51, 1
      %s53 = scalar_select %p50, %s51, %s52
      %p56 = pneg %p50
      %p57 = scmp.eq.s32.totalorder %s22, 8
      %p58 = por %p56, %p57
      %p59 = scmp.ne.s32.totalorder %s51, %s54
      %p60 = scmp.eq.s32.totalorder %s22, 0
      %p61 = por %p59, %p60
      %p62 = scmp.ne.s32.totalorder %s51, %s54
      %p63 = scmp.eq.s32.totalorder %s27, 8
      %p64 = por %p62, %p63
      %p65 = scmp.ne.s32.totalorder %s54, %s55
      %p66 = scmp.eq.s32.totalorder %s27, 0
      %p67 = por %p65, %p66
      %p68 = scmp.ne.s32.totalorder %s54, %s55
      %p69 = scmp.eq.s32.totalorder %s28, 8
      %p70 = por %p68, %p69
      %p72 = scmp.ne.s32.totalorder %s55, %s71
      %p73 = scmp.eq.s32.totalorder %s28, 0
      %p74 = por %p72, %p73
      %s75 = ssub.s32 %s30, %s44
      %p76 = scmp.eq.s32.totalorder %s75, 0
      %s78 = sadd.s32 %s77, 1
      %s79 = scalar_select %p76, %s77, %s78
      %p82 = pneg %p76
      %p83 = scmp.eq.s32.totalorder %s22, 8
      %p84 = por %p82, %p83
      %p85 = scmp.ne.s32.totalorder %s77, %s80
      %p86 = scmp.eq.s32.totalorder %s22, 0
      %p87 = por %p85, %p86
      %p88 = scmp.ne.s32.totalorder %s77, %s80
      %p89 = scmp.eq.s32.totalorder %s27, 8
      %p90 = por %p88, %p89
      %p91 = scmp.ne.s32.totalorder %s80, %s81
      %p92 = scmp.eq.s32.totalorder %s27, 0
      %p93 = por %p91, %p92
      %p94 = scmp.ne.s32.totalorder %s80, %s81
      %p95 = scmp.eq.s32.totalorder %s28, 8
      %p96 = por %p94, %p95
      %p98 = scmp.ne.s32.totalorder %s81, %s97
      %p99 = scmp.eq.s32.totalorder %s28, 0
      %p100 = por %p98, %p99
      %s101 = ssub.s32 %s30, %s44
      %p102 = scmp.eq.s32.totalorder %s101, 0
      %s104 = sadd.s32 %s103, 1
      %s105 = scalar_select %p102, %s103, %s104
      %p108 = pneg %p102
      %p109 = scmp.eq.s32.totalorder %s22, 8
      %p110 = por %p108, %p109
      %p111 = scmp.ne.s32.totalorder %s103, %s106
      %p112 = scmp.eq.s32.totalorder %s22, 0
      %p113 = por %p111, %p112
      %p114 = scmp.ne.s32.totalorder %s103, %s106
      %p115 = scmp.eq.s32.totalorder %s27, 8
      %p116 = por %p114, %p115
      %p117 = scmp.ne.s32.totalorder %s106, %s107
      %p118 = scmp.eq.s32.totalorder %s27, 0
      %p119 = por %p117, %p118
      %p120 = scmp.ne.s32.totalorder %s106, %s107
      %p121 = scmp.eq.s32.totalorder %s28, 8
      %p122 = por %p120, %p121
      %p124 = scmp.ne.s32.totalorder %s107, %s123
      %p125 = scmp.eq.s32.totalorder %s28, 0
      %p126 = por %p124, %p125
      %s127 = ssub.s32 %s31, 1
      %p128 = scmp.gt.s32.totalorder %s127, 0
      %s129 = scalar_select %p128, %s127, 0
      %s130 = ssub.s32 %s40, 1
      %p131 = scmp.gt.s32.totalorder %s130, 0
      %s132 = scalar_select %p131, %s130, 0
      %s133 = ssub.s32 %s30, %s44
      %s134 = ssub.s32 %s129, %s132
      %s135 = sor.u32 %s133, %s134
      %p136 = scmp.eq.s32.totalorder %s135, 0
      %s138 = sadd.s32 %s137, 1
      %s139 = scalar_select %p136, %s137, %s138
      %p142 = pneg %p136
      %p143 = scmp.eq.s32.totalorder %s22, 8
      %p144 = por %p142, %p143
      %p145 = scmp.ne.s32.totalorder %s137, %s140
      %p146 = scmp.eq.s32.totalorder %s22, 0
      %p147 = por %p145, %p146
      %p148 = scmp.ne.s32.totalorder %s137, %s140
      %p149 = scmp.eq.s32.totalorder %s27, 8
      %p150 = por %p148, %p149
      %p151 = scmp.ne.s32.totalorder %s140, %s141
      %p152 = scmp.eq.s32.totalorder %s27, 0
      %p153 = por %p151, %p152
      %p154 = scmp.ne.s32.totalorder %s140, %s141
      %p155 = scmp.eq.s32.totalorder %s28, 8
      %p156 = por %p154, %p155
      %p158 = scmp.ne.s32.totalorder %s141, %s157
      %p159 = scmp.eq.s32.totalorder %s28, 0
      %p160 = por %p158, %p159
      %s161 = ssub.s32 %s31, 1
      %p162 = scmp.gt.s32.totalorder %s161, 0
      %s163 = scalar_select %p162, %s161, 0
      %s164 = ssub.s32 %s40, 1
      %p165 = scmp.gt.s32.totalorder %s164, 0
      %s166 = scalar_select %p165, %s164, 0
      %s167 = ssub.s32 %s30, %s44
      %s168 = ssub.s32 %s163, %s166
      %s169 = sor.u32 %s167, %s168
      %p170 = scmp.eq.s32.totalorder %s169, 0
      %s172 = sadd.s32 %s171, 1
      %s173 = scalar_select %p170, %s171, %s172
      %p176 = pneg %p170
      %p177 = scmp.eq.s32.totalorder %s22, 8
      %p178 = por %p176, %p177
      %p179 = scmp.ne.s32.totalorder %s171, %s174
      %p180 = scmp.eq.s32.totalorder %s22, 0
      %p181 = por %p179, %p180
      %p182 = scmp.ne.s32.totalorder %s171, %s174
      %p183 = scmp.eq.s32.totalorder %s27, 8
      %p184 = por %p182, %p183
      %p185 = scmp.ne.s32.totalorder %s174, %s175
      %p186 = scmp.eq.s32.totalorder %s27, 0
      %p187 = por %p185, %p186
      %p188 = scmp.ne.s32.totalorder %s174, %s175
      %p189 = scmp.eq.s32.totalorder %s28, 8
      %p190 = por %p188, %p189
      %p192 = scmp.ne.s32.totalorder %s175, %s191
      %p193 = scmp.eq.s32.totalorder %s28, 0
      %p194 = por %p192, %p193
      %s195 = ssub.s32 %s30, %s44
      %p196 = scmp.eq.s32.totalorder %s195, 0
      %s198 = sadd.s32 %s197, 1
      %s199 = scalar_select %p196, %s197, %s198
      %p202 = pneg %p196
      %p203 = scmp.eq.s32.totalorder %s22, 8
      %p204 = por %p202, %p203
      %p205 = scmp.ne.s32.totalorder %s197, %s200
      %p206 = scmp.eq.s32.totalorder %s22, 0
      %p207 = por %p205, %p206
      %p208 = scmp.ne.s32.totalorder %s197, %s200
      %p209 = scmp.eq.s32.totalorder %s27, 8
      %p210 = por %p208, %p209
      %p211 = scmp.ne.s32.totalorder %s200, %s201
      %p212 = scmp.eq.s32.totalorder %s27, 0
      %p213 = por %p211, %p212
      %p214 = scmp.ne.s32.totalorder %s200, %s201
      %p215 = scmp.eq.s32.totalorder %s28, 8
      %p216 = por %p214, %p215
      %p218 = scmp.ne.s32.totalorder %s201, %s217
      %p219 = scmp.eq.s32.totalorder %s28, 0
      %p220 = por %p218, %p219
      %s221 = ssub.s32 %s30, %s44
      %p222 = scmp.eq.s32.totalorder %s221, 0
      %s224 = sadd.s32 %s223, 1
      %s225 = scalar_select %p222, %s223, %s224
      %p228 = pneg %p222
      %p229 = scmp.eq.s32.totalorder %s22, 8
      %p230 = por %p228, %p229
      %p231 = scmp.ne.s32.totalorder %s223, %s226
      %p232 = scmp.eq.s32.totalorder %s22, 0
      %p233 = por %p231, %p232
      %p234 = scmp.ne.s32.totalorder %s223, %s226
      %p235 = scmp.eq.s32.totalorder %s27, 8
      %p236 = por %p234, %p235
      %p237 = scmp.ne.s32.totalorder %s226, %s227
      %p238 = scmp.eq.s32.totalorder %s27, 0
      %p239 = por %p237, %p238
      %p240 = scmp.ne.s32.totalorder %s226, %s227
      %p241 = scmp.eq.s32.totalorder %s28, 8
      %p242 = por %p240, %p241
      %p244 = scmp.ne.s32.totalorder %s227, %s243
      %p245 = scmp.eq.s32.totalorder %s28, 0
      %p246 = por %p244, %p245
      %s247 = ssub.s32 %s30, %s44
      %p248 = scmp.eq.s32.totalorder %s247, 0
      %s250 = sadd.s32 %s249, 1
      %s251 = scalar_select %p248, %s249, %s250
      %p254 = pneg %p248
      %p255 = scmp.eq.s32.totalorder %s22, 8
      %p256 = por %p254, %p255
      %p257 = scmp.ne.s32.totalorder %s249, %s252
      %p258 = scmp.eq.s32.totalorder %s22, 0
      %p259 = por %p257, %p258
      %p260 = scmp.ne.s32.totalorder %s249, %s252
      %p261 = scmp.eq.s32.totalorder %s27, 8
      %p262 = por %p260, %p261
      %p263 = scmp.ne.s32.totalorder %s252, %s253
      %p264 = scmp.eq.s32.totalorder %s27, 0
      %p265 = por %p263, %p264
      %p266 = scmp.ne.s32.totalorder %s252, %s253
      %p267 = scmp.eq.s32.totalorder %s28, 8
      %p268 = por %p266, %p267
      %p270 = scmp.ne.s32.totalorder %s253, %s269
      %p271 = scmp.eq.s32.totalorder %s28, 0
      %p272 = por %p270, %p271
      %s274 = sadd.s32 %s273, 1
      %p277 = scmp.eq.s32.totalorder %s22, 8
      %p278 = scmp.ne.s32.totalorder %s273, %s275
      %p279 = scmp.eq.s32.totalorder %s22, 0
      %p280 = por %p278, %p279
      %p281 = scmp.ne.s32.totalorder %s273, %s275
      %p282 = scmp.eq.s32.totalorder %s27, 8
      %p283 = por %p281, %p282
      %p284 = scmp.ne.s32.totalorder %s275, %s276
      %p285 = scmp.eq.s32.totalorder %s27, 0
      %p286 = por %p284, %p285
      %p287 = scmp.ne.s32.totalorder %s275, %s276
      %p288 = scmp.eq.s32.totalorder %s28, 8
      %p289 = por %p287, %p288
      %p291 = scmp.ne.s32.totalorder %s276, %s290
      %p292 = scmp.eq.s32.totalorder %s28, 0
      %p293 = por %p291, %p292
      %s294 = ssub.s32 %s29, %s48
      %p295 = scmp.eq.s32.totalorder %s294, 0
      %s297 = sadd.s32 %s296, 1
      %s298 = scalar_select %p295, %s296, %s297
      %p301 = pneg %p295
      %p302 = scmp.eq.s32.totalorder %s22, 8
      %p303 = por %p301, %p302
      %p304 = scmp.ne.s32.totalorder %s296, %s299
      %p305 = scmp.eq.s32.totalorder %s22, 0
      %p306 = por %p304, %p305
      %p307 = scmp.ne.s32.totalorder %s296, %s299
      %p308 = scmp.eq.s32.totalorder %s27, 8
      %p309 = por %p307, %p308
      %p310 = scmp.ne.s32.totalorder %s299, %s300
      %p311 = scmp.eq.s32.totalorder %s27, 0
      %p312 = por %p310, %p311
      %p313 = scmp.ne.s32.totalorder %s299, %s300
      %p314 = scmp.eq.s32.totalorder %s28, 8
      %p315 = por %p313, %p314
      %p317 = scmp.ne.s32.totalorder %s300, %s316
      %p318 = scmp.eq.s32.totalorder %s28, 0
      %p319 = por %p317, %p318
      %p320 = scmp.le.s32.totalorder 1, %s22
      %p321 = scmp.lt.s32.totalorder %s22, 10
      %p322 = pnand %p320, %p321
      %p323 = pneg %p322
      // Predicated region
      $region9: #{nbeats_forward.1} parent=5 // pred_check
        _
      $region10: #{nbeats_forward.1} parent=5 // pred_check_branch
        %325 = sbr.rel (%p322) target = $region12
      $region11: #{nbeats_forward.1} parent=5 // pred_region
        %s326 = ssub.s32 %s22, 1
        // Predicated region
        $region13: #{nbeats_forward.1} parent=11 // pred_check
          %p327 = pneg %p67
        $region14: #{nbeats_forward.1} parent=11 // pred_check_branch
          %329 = sbr.rel (%p327) target = $region16
        $region15: #{nbeats_forward.1} parent=11 // pred_region
          %p330 = scmp.lt.s32.totalorder %s32, 0
          %s331 = scalar_select %p330, %s32, 0
          %s332 = smul.addr %s331, 8
          %s333 = scalar_lea.vmem %s0, %s332
        $region16: #{nbeats_forward.1} parent=11 // pred_fallthru
          _
        // Predicated region
        $region17: #{nbeats_forward.1} parent=11 // pred_check
          %p334 = pneg %p286
        $region18: #{nbeats_forward.1} parent=11 // pred_check_branch
          %336 = sbr.rel (%p334) target = $region20
        $region19: #{nbeats_forward.1} parent=11 // pred_region
          %s338 = ssub.s32 16, 16
          %339 = vsyncadd [#allocation6], %s338
          %s341 = sshll.u32 %s8, 4
          %s342 = int_to_ptr.vmem [resolvable:$true] %s341
          %344 = dma.vmem_to_smem %s342, 16, [#allocation10], [#allocation6]
        $region20: #{nbeats_forward.1} parent=11 // pred_fallthru
          _
      $region12: #{nbeats_forward.1} parent=5 // pred_fallthru
        _
      %p345 = scmp.lt.s32.totalorder %s22, 9
      // Predicated region
      $region21: #{nbeats_forward.1} parent=5 // pred_check
        %p346 = pneg %p345
      $region22: #{nbeats_forward.1} parent=5 // pred_check_branch
        %348 = sbr.rel (%p346) target = $region24
      $region23: #{nbeats_forward.1} parent=5 // pred_region
        // Predicated region
        $region25: #{nbeats_forward.1} parent=23 // pred_check
          %p349 = pneg %p87
        $region26: #{nbeats_forward.1} parent=23 // pred_check_branch
          %351 = sbr.rel (%p349) target = $region28
        $region27: #{nbeats_forward.1} parent=23 // pred_region
          %s352 = sand.u32 %s77, 1
          %s353 = scalar_lea.sflag [#allocation5], %s352
          %s354 = sand.u32 %s77, 1
          %s355 = smul.addr %s354, 64
          %s356 = scalar_lea.vmem [#allocation4], %s355
          %s358 = ssub.s32 1024, 1024
          %359 = vsyncadd %s353, %s358
          %s360 = smul.addr %s30, 16
          %s361 = smul.addr %s360, 64
          %s362 = scalar_lea.hbm %s1, %s361
          %s363 = sshll.u32 %s356, 4
          %s364 = int_to_ptr.vmem [resolvable:$true] %s363
          %369 = dma.hbm_to_vmem [thread:$0]  %s362, 1024, %s364, %s353, 64, 64, 4
        $region28: #{nbeats_forward.1} parent=23 // pred_fallthru
          _
        // Predicated region
        $region29: #{nbeats_forward.1} parent=23 // pred_check
          %p370 = pneg %p113
        $region30: #{nbeats_forward.1} parent=23 // pred_check_branch
          %372 = sbr.rel (%p370) target = $region32
        $region31: #{nbeats_forward.1} parent=23 // pred_region
          %p373 = scmp.lt.s32.totalorder %s30, 2
          %s374 = scalar_select %p373, %s30, 2
          %s375 = scalar_lea.vmem %s2, %s374
        $region32: #{nbeats_forward.1} parent=23 // pred_fallthru
          _
        // Predicated region
        $region33: #{nbeats_forward.1} parent=23 // pred_check
          %p376 = pneg %p147
        $region34: #{nbeats_forward.1} parent=23 // pred_check_branch
          %378 = sbr.rel (%p376) target = $region36
        $region35: #{nbeats_forward.1} parent=23 // pred_region
          %s379 = sand.u32 %s22, 1
          %s380 = scalar_lea.sflag [#allocation8], %s379
          %s381 = sand.u32 %s137, 1
          %s382 = smul.addr %s381, 64
          %s383 = scalar_lea.vmem [#allocation7], %s382
          %s384 = ssub.s32 %s31, 1
          %p385 = scmp.gt.s32.totalorder %s384, 0
          %s386 = scalar_select %p385, %s384, 0
          %s388 = ssub.s32 1024, 1024
          %389 = vsyncadd %s380, %s388
          %s390 = smul.addr %s386, 16
          %s391 = smul.addr %s30, 32
          %s392 = sadd.s32 %s390, %s391
          %s393 = smul.addr %s392, 64
          %s394 = scalar_lea.hbm %s3, %s393
          %s395 = sshll.u32 %s383, 4
          %s396 = int_to_ptr.vmem [resolvable:$true] %s395
          %401 = dma.hbm_to_vmem [thread:$0]  %s394, 1024, %s396, %s380, 64, 64, 4
        $region36: #{nbeats_forward.1} parent=23 // pred_fallthru
          _
        // Predicated region
        $region37: #{nbeats_forward.1} parent=23 // pred_check
          %p402 = pneg %p181
        $region38: #{nbeats_forward.1} parent=23 // pred_check_branch
          %404 = sbr.rel (%p402) target = $region40
        $region39: #{nbeats_forward.1} parent=23 // pred_region
          %s405 = ssub.s32 %s31, 1
          %p406 = scmp.gt.s32.totalorder %s405, 0
          %s407 = scalar_select %p406, %s405, 0
          %p408 = scmp.lt.s32.totalorder %s30, 2
          %s409 = scalar_select %p408, %s30, 2
          %p410 = scmp.lt.s32.totalorder %s407, 1
          %s411 = scalar_select %p410, %s407, 1
          %s412 = smul.addr %s409, 2
          %s413 = sadd.s32 %s411, %s412
          %s414 = scalar_lea.vmem %s4, %s413
          %s415 = ssub.s32 %s31, 1
          %p416 = scmp.gt.s32.totalorder %s415, 0
          %s417 = scalar_select %p416, %s415, 0
        $region40: #{nbeats_forward.1} parent=23 // pred_fallthru
          _
        // Predicated region
        $region41: #{nbeats_forward.1} parent=23 // pred_check
          %p418 = pneg %p207
        $region42: #{nbeats_forward.1} parent=23 // pred_check_branch
          %420 = sbr.rel (%p418) target = $region44
        $region43: #{nbeats_forward.1} parent=23 // pred_region
          %s421 = sand.u32 %s22, 1
          %s422 = scalar_lea.sflag [#allocation8], %s421
          %s423 = sand.u32 %s197, 1
          %s424 = smul.addr %s423, 64
          %s425 = scalar_lea.vmem [#allocation9], %s424
          %s427 = ssub.s32 1024, 1024
          %428 = vsyncadd %s422, %s427
          %s429 = smul.addr %s30, 16
          %s430 = smul.addr %s429, 64
          %s431 = scalar_lea.hbm %s5, %s430
          %s432 = sshll.u32 %s425, 4
          %s433 = int_to_ptr.vmem [resolvable:$true] %s432
          %438 = dma.hbm_to_vmem [thread:$0]  %s431, 1024, %s433, %s422, 64, 64, 4
        $region44: #{nbeats_forward.1} parent=23 // pred_fallthru
          _
        // Predicated region
        $region45: #{nbeats_forward.1} parent=23 // pred_check
          %p439 = pneg %p233
        $region46: #{nbeats_forward.1} parent=23 // pred_check_branch
          %441 = sbr.rel (%p439) target = $region48
        $region47: #{nbeats_forward.1} parent=23 // pred_region
          %p442 = scmp.lt.s32.totalorder %s30, 2
          %s443 = scalar_select %p442, %s30, 2
          %s444 = scalar_lea.vmem %s6, %s443
        $region48: #{nbeats_forward.1} parent=23 // pred_fallthru
          _
        // Predicated region
        $region49: #{nbeats_forward.1} parent=23 // pred_check
          %p445 = pneg %p259
        $region50: #{nbeats_forward.1} parent=23 // pred_check_branch
          %447 = sbr.rel (%p445) target = $region52
        $region51: #{nbeats_forward.1} parent=23 // pred_region
          %p448 = scmp.lt.s32.totalorder %s30, 2
          %s449 = scalar_select %p448, %s30, 2
          %s450 = scalar_lea.vmem %s7, %s449
        $region52: #{nbeats_forward.1} parent=23 // pred_fallthru
          _
      $region24: #{nbeats_forward.1} parent=5 // pred_fallthru
        _
      %p451 = scmp.le.s32.totalorder 1, %s22
      %p452 = scmp.lt.s32.totalorder %s22, 10
      %p453 = pnand %p451, %p452
      %p454 = pneg %p453
      // Predicated region
      $region53: #{nbeats_forward.1} parent=5 // pred_check
        _
      $region54: #{nbeats_forward.1} parent=5 // pred_check_branch
        %456 = sbr.rel (%p453) target = $region56
      $region55: #{nbeats_forward.1} parent=5 // pred_region
        %s457 = ssub.s32 %s22, 1
        %s458 = sand.u32 %s80, 1
        %s459 = scalar_lea.sflag [#allocation5], %s458
        %s460 = sand.u32 %s80, 1
        %s461 = smul.addr %s460, 64
        %s462 = scalar_lea.vmem [#allocation4], %s461
        // Predicated region
        $region57: #{nbeats_forward.1} parent=55 // pred_check
          %p463 = pneg %p93
        $region58: #{nbeats_forward.1} parent=55 // pred_check_branch
          %465 = sbr.rel (%p463) target = $region60
        $region59: #{nbeats_forward.1} parent=55 // pred_region
          %466 = dma.done %s459, 1024
        $region60: #{nbeats_forward.1} parent=55 // pred_fallthru
          _
        %s467 = sand.u32 %s27, 1
        %s468 = scalar_lea.sflag [#allocation8], %s467
        %s469 = sand.u32 %s140, 1
        %s470 = smul.addr %s469, 64
        %s471 = scalar_lea.vmem [#allocation7], %s470
        // Predicated region
        $region61: #{nbeats_forward.1} parent=55 // pred_check
          %p472 = pneg %p153
        $region62: #{nbeats_forward.1} parent=55 // pred_check_branch
          %474 = sbr.rel (%p472) target = $region64
        $region63: #{nbeats_forward.1} parent=55 // pred_region
          %475 = dma.done %s468, 1024
        $region64: #{nbeats_forward.1} parent=55 // pred_fallthru
          _
        %s476 = sand.u32 %s27, 1
        %s477 = scalar_lea.sflag [#allocation8], %s476
        %s478 = sand.u32 %s200, 1
        %s479 = smul.addr %s478, 64
        %s480 = scalar_lea.vmem [#allocation9], %s479
        // Predicated region
        $region65: #{nbeats_forward.1} parent=55 // pred_check
          %p481 = pneg %p213
        $region66: #{nbeats_forward.1} parent=55 // pred_check_branch
          %483 = sbr.rel (%p481) target = $region68
        $region67: #{nbeats_forward.1} parent=55 // pred_region
          %484 = dma.done %s477, 1024
        $region68: #{nbeats_forward.1} parent=55 // pred_fallthru
          _
        // Predicated region
        $region69: #{nbeats_forward.1} parent=55 // pred_check
          %p485 = pneg %p286
        $region70: #{nbeats_forward.1} parent=55 // pred_check_branch
          %487 = sbr.rel (%p485) target = $region72
        $region71: #{nbeats_forward.1} parent=55 // pred_region
          %488 = dma.done [#allocation6], 16
        $region72: #{nbeats_forward.1} parent=55 // pred_fallthru
          _
        %489 = sfence
        %p490 = scmp.lt.s32.totalorder %s32, 0
        %s491 = scalar_select %p490, %s32, 0
        %s492 = smul.addr %s491, 8
        %s493 = scalar_lea.vmem %s0, %s492
        %p494 = pneg %p67
        %p495 = pneg %p64
        %s496 = sand.u32 %s80, 1
        %s497 = scalar_lea.sflag [#allocation5], %s496
        %s498 = sand.u32 %s80, 1
        %s499 = smul.addr %s498, 64
        %s500 = scalar_lea.vmem [#allocation4], %s499
        %p501 = pneg %p93
        %p502 = pneg %p90
        %p503 = scmp.lt.s32.totalorder %s33, 2
        %s504 = scalar_select %p503, %s33, 2
        %s505 = scalar_lea.vmem %s2, %s504
        %p506 = pneg %p119
        %p507 = pneg %p116
        %s508 = sand.u32 %s27, 1
        %s509 = scalar_lea.sflag [#allocation8], %s508
        %s510 = sand.u32 %s140, 1
        %s511 = smul.addr %s510, 64
        %s512 = scalar_lea.vmem [#allocation7], %s511
        %p513 = pneg %p153
        %p514 = pneg %p150
        %s515 = ssub.s32 %s34, 1
        %p516 = scmp.gt.s32.totalorder %s515, 0
        %s517 = scalar_select %p516, %s515, 0
        %p518 = scmp.lt.s32.totalorder %s33, 2
        %s519 = scalar_select %p518, %s33, 2
        %p520 = scmp.lt.s32.totalorder %s517, 1
        %s521 = scalar_select %p520, %s517, 1
        %s522 = smul.addr %s519, 2
        %s523 = sadd.s32 %s521, %s522
        %s524 = scalar_lea.vmem %s4, %s523
        %p525 = pneg %p187
        %p526 = pneg %p184
        %s527 = sand.u32 %s27, 1
        %s528 = scalar_lea.sflag [#allocation8], %s527
        %s529 = sand.u32 %s200, 1
        %s530 = smul.addr %s529, 64
        %s531 = scalar_lea.vmem [#allocation9], %s530
        %p532 = pneg %p213
        %p533 = pneg %p210
        %p534 = scmp.lt.s32.totalorder %s33, 2
        %s535 = scalar_select %p534, %s33, 2
        %s536 = scalar_lea.vmem %s6, %s535
        %p537 = pneg %p239
        %p538 = pneg %p236
        %p539 = scmp.lt.s32.totalorder %s33, 2
        %s540 = scalar_select %p539, %s33, 2
        %s541 = scalar_lea.vmem %s7, %s540
        %p542 = pneg %p265
        %p543 = pneg %p262
        %p544 = pneg %p286
        %p545 = pneg %p283
        %p546 = pneg %p312
        %p547 = pneg %p309
        %p548 = scmp.lt.s32.totalorder %s32, 0
        %s549 = scalar_select %p548, %s32, 0
        %s550 = smul.addr %s549, 8
        %s551 = scalar_lea.vmem %s9, %s550
        %p552 = scmp.lt.s32.totalorder %s32, 0
        %s553 = scalar_select %p552, %s32, 0
        %s554 = smul.addr %s553, 8
        %s555 = scalar_lea.vmem %s0, %s554
        %p556 = scmp.lt.s32.totalorder %s33, 2
        %s557 = scalar_select %p556, %s33, 2
        %s558 = scalar_lea.vmem %s2, %s557
        %s559 = ssub.s32 %s34, 1
        %p560 = scmp.gt.s32.totalorder %s559, 0
        %s561 = scalar_select %p560, %s559, 0
        %s562 = ssub.s32 %s34, 1
        %p563 = scmp.gt.s32.totalorder %s562, 0
        %s564 = scalar_select %p563, %s562, 0
        %p565 = scmp.lt.s32.totalorder %s33, 2
        %s566 = scalar_select %p565, %s33, 2
        %p567 = scmp.lt.s32.totalorder %s564, 1
        %s568 = scalar_select %p567, %s564, 1
        %s569 = smul.addr %s566, 2
        %s570 = sadd.s32 %s568, %s569
        %s571 = scalar_lea.vmem %s4, %s570
        %s572 = ssub.s32 %s34, 1
        %p573 = scmp.gt.s32.totalorder %s572, 0
        %s574 = scalar_select %p573, %s572, 0
        %p575 = scmp.lt.s32.totalorder %s33, 2
        %s576 = scalar_select %p575, %s33, 2
        %s577 = scalar_lea.vmem %s6, %s576
        %p578 = scmp.lt.s32.totalorder %s33, 2
        %s579 = scalar_select %p578, %s33, 2
        %s580 = scalar_lea.vmem %s7, %s579
        %p581 = scmp.lt.s32.totalorder %s32, 0
        %s582 = scalar_select %p581, %s32, 0
        %s583 = smul.addr %s582, 8
        %s584 = scalar_lea.vmem %s9, %s583
        %p586 = scmp.eq.s32.totalorder %s33, 0
        %p587 = scmp.eq.s32.totalorder %s34, 0
        %p588 = pnand %p586, %p587
        %p589 = pneg %p588
        // Predicated region
        $region73: #{nbeats_forward.1} parent=55 // pred_check
          _
        $region74: #{nbeats_forward.1} parent=55 // pred_check_branch
          %591 = sbr.rel (%p588) target = $region76
        $region75: #{nbeats_forward.1} parent=55 // pred_region
          %v592 = vld [vmem:[%s555] sm:$0xff]
          %593 = vst [vmem:[#allocation2] sm:$0xff] %v592
          %594 = vst [vmem:[%s584] sm:$0xff] 0.0
        $region76: #{nbeats_forward.1} parent=55 // pred_fallthru
          _
        // Predicated region
        $region77: #{nbeats_forward.1} parent=55 // pred_check
          %p595 = pneg %p587
        $region78: #{nbeats_forward.1} parent=55 // pred_check_branch
          %597 = sbr.rel (%p595) target = $region80
        $region79: #{nbeats_forward.1} parent=55 // pred_region
          %v598 = vld [vmem:[#allocation2] sm:$0xff]
          %v599 = vpack.c.bf16 %v598, %v598
          %v600 = vld [vmem:[%s462] sm:$0xf]
          %v601 = vld [vmem:[%s462 + $0x4] sm:$0xf]
          %v602 = vld [vmem:[%s462 + $0x8] sm:$0xf]
          %v603 = vld [vmem:[%s462 + $0xc] sm:$0xf]
          %v604 = vld [vmem:[%s462 + $0x10] sm:$0xf]
          %v605 = vld [vmem:[%s462 + $0x14] sm:$0xf]
          %v606 = vld [vmem:[%s462 + $0x18] sm:$0xf]
          %v607 = vld [vmem:[%s462 + $0x1c] sm:$0xf]
          %v608 = vld [vmem:[%s462 + $0x20] sm:$0xf]
          %v609 = vld [vmem:[%s462 + $0x24] sm:$0xf]
          %v610 = vld [vmem:[%s462 + $0x28] sm:$0xf]
          %v611 = vld [vmem:[%s462 + $0x2c] sm:$0xf]
          %v612 = vld [vmem:[%s462 + $0x30] sm:$0xf]
          %v613 = vld [vmem:[%s462 + $0x34] sm:$0xf]
          %v614 = vld [vmem:[%s462 + $0x38] sm:$0xf]
          %v615 = vld [vmem:[%s462 + $0x3c] sm:$0xf]
          %v616 = vld [vmem:[%s558] sm:$0x1]
          %v618 = vlaneseq
          %v619 = vshrl.u32 %v618, 7
          %v620 = vsub.s32 0, %v619
          %v621 = vrot.slane %v616, %v620
          %v639 = vunpack.c.l.b16 %v600
          %v640 = vunpack.c.l.b16 %v601
          %v641 = vunpack.c.l.b16 %v602
          %v642 = vunpack.c.l.b16 %v603
          %v643 = vunpack.c.l.b16 %v604
          %v644 = vunpack.c.l.b16 %v605
          %v645 = vunpack.c.l.b16 %v606
          %v646 = vunpack.c.l.b16 %v607
          %v647 = vunpack.c.l.b16 %v608
          %v648 = vunpack.c.l.b16 %v609
          %v649 = vunpack.c.l.b16 %v610
          %v650 = vunpack.c.l.b16 %v611
          %v651 = vunpack.c.l.b16 %v612
          %v652 = vunpack.c.l.b16 %v613
          %v653 = vunpack.c.l.b16 %v614
          %v654 = vunpack.c.l.b16 %v615
          %v655 = vpack.c.b16 %v640, %v639
          %v656 = vpack.c.b16 %v642, %v641
          %v657 = vpack.c.b16 %v644, %v643
          %v658 = vpack.c.b16 %v646, %v645
          %v659 = vpack.c.b16 %v648, %v647
          %v660 = vpack.c.b16 %v650, %v649
          %v661 = vpack.c.b16 %v652, %v651
          %v662 = vpack.c.b16 %v654, %v653
          %671 = vmatprep.subr.bf16.mxu0 0
          %672 = vmatpush1.bf16.msra.mxu0 %v655
          %673 = vmatprep.subr.bf16.mxu0 0
          %674 = vmatpush1.bf16.msra.mxu0 %v656
          %675 = vmatprep.subr.bf16.mxu0 0
          %676 = vmatpush1.bf16.msra.mxu0 %v657
          %677 = vmatprep.subr.bf16.mxu0 0
          %678 = vmatpush1.bf16.msra.mxu0 %v658
          %679 = vmatprep.subr.bf16.mxu0 0
          %680 = vmatpush1.bf16.msra.mxu0 %v659
          %681 = vmatprep.subr.bf16.mxu0 0
          %682 = vmatpush1.bf16.msra.mxu0 %v660
          %683 = vmatprep.subr.bf16.mxu0 0
          %684 = vmatpush1.bf16.msra.mxu0 %v661
          %685 = vmatprep.subr.bf16.mxu0 0
          %686 = vmatpush1.bf16.msra.mxu0 %v662
          %687 = vmatprep.subr.bf16.mxu0 0
          %688 = vmatpush1.bf16.msra.mxu0 0
          %689 = vmatprep.subr.bf16.mxu0 0
          %690 = vmatpush1.bf16.msra.mxu0 0
          %691 = vmatprep.subr.bf16.mxu0 0
          %692 = vmatpush1.bf16.msra.mxu0 0
          %693 = vmatprep.subr.bf16.mxu0 0
          %694 = vmatpush1.bf16.msra.mxu0 0
          %695 = vmatprep.subr.bf16.mxu0 0
          %696 = vmatpush1.bf16.msra.mxu0 0
          %697 = vmatprep.subr.bf16.mxu0 0
          %698 = vmatpush1.bf16.msra.mxu0 0
          %699 = vmatprep.subr.bf16.mxu0 0
          %700 = vmatpush1.bf16.msra.mxu0 0
          %701 = vmatprep.subr.bf16.mxu0 0
          %702 = vmatpush1.bf16.msra.mxu0 0
          %703 = vmatprep.mubr.bf16.mxu0 0
          %704 = vmatmul.mubr.bf16.gmra.mrb[0].mxu0 %v599
          %v705 = vpop.f32.mrb[0].mxu0
          %v706 = vadd.f32 %v621, %v705
          %v707 = vpop.f32.mrb[0].mxu0
          %v708 = vpop.f32.mrb[0].mxu0
          %v709 = vpop.f32.mrb[0].mxu0
          %710 = vdwg.mxu0
          %v711 = vmax.f32 %v706, 0.0
          %712 = vst [vmem:[#allocation3] sm:$0xff] %v711
        $region80: #{nbeats_forward.1} parent=55 // pred_fallthru
          _
        %p713 = scmp.gt.s32.totalorder %s34, 0
        // Predicated region
        $region81: #{nbeats_forward.1} parent=55 // pred_check
          %p714 = pneg %p713
        $region82: #{nbeats_forward.1} parent=55 // pred_check_branch
          %716 = sbr.rel (%p714) target = $region84
        $region83: #{nbeats_forward.1} parent=55 // pred_region
          %v717 = vld [vmem:[#allocation3] sm:$0xff]
          %v718 = vpack.c.bf16 %v717, %v717
          %v719 = vld [vmem:[%s471] sm:$0xf]
          %v720 = vld [vmem:[%s471 + $0x4] sm:$0xf]
          %v721 = vld [vmem:[%s471 + $0x8] sm:$0xf]
          %v722 = vld [vmem:[%s471 + $0xc] sm:$0xf]
          %v723 = vld [vmem:[%s471 + $0x10] sm:$0xf]
          %v724 = vld [vmem:[%s471 + $0x14] sm:$0xf]
          %v725 = vld [vmem:[%s471 + $0x18] sm:$0xf]
          %v726 = vld [vmem:[%s471 + $0x1c] sm:$0xf]
          %v727 = vld [vmem:[%s471 + $0x20] sm:$0xf]
          %v728 = vld [vmem:[%s471 + $0x24] sm:$0xf]
          %v729 = vld [vmem:[%s471 + $0x28] sm:$0xf]
          %v730 = vld [vmem:[%s471 + $0x2c] sm:$0xf]
          %v731 = vld [vmem:[%s471 + $0x30] sm:$0xf]
          %v732 = vld [vmem:[%s471 + $0x34] sm:$0xf]
          %v733 = vld [vmem:[%s471 + $0x38] sm:$0xf]
          %v734 = vld [vmem:[%s471 + $0x3c] sm:$0xf]
          %v735 = vld [vmem:[%s571] sm:$0x1]
          %v737 = vlaneseq
          %v738 = vshrl.u32 %v737, 7
          %v739 = vsub.s32 0, %v738
          %v740 = vrot.slane %v735, %v739
          %v758 = vunpack.c.l.b16 %v719
          %v759 = vunpack.c.l.b16 %v720
          %v760 = vunpack.c.l.b16 %v721
          %v761 = vunpack.c.l.b16 %v722
          %v762 = vunpack.c.l.b16 %v723
          %v763 = vunpack.c.l.b16 %v724
          %v764 = vunpack.c.l.b16 %v725
          %v765 = vunpack.c.l.b16 %v726
          %v766 = vunpack.c.l.b16 %v727
          %v767 = vunpack.c.l.b16 %v728
          %v768 = vunpack.c.l.b16 %v729
          %v769 = vunpack.c.l.b16 %v730
          %v770 = vunpack.c.l.b16 %v731
          %v771 = vunpack.c.l.b16 %v732
          %v772 = vunpack.c.l.b16 %v733
          %v773 = vunpack.c.l.b16 %v734
          %v774 = vpack.c.b16 %v759, %v758
          %v775 = vpack.c.b16 %v761, %v760
          %v776 = vpack.c.b16 %v763, %v762
          %v777 = vpack.c.b16 %v765, %v764
          %v778 = vpack.c.b16 %v767, %v766
          %v779 = vpack.c.b16 %v769, %v768
          %v780 = vpack.c.b16 %v771, %v770
          %v781 = vpack.c.b16 %v773, %v772
          %790 = vmatprep.subr.bf16.mxu0 0
          %791 = vmatpush1.bf16.msra.mxu0 %v774
          %792 = vmatprep.subr.bf16.mxu0 0
          %793 = vmatpush1.bf16.msra.mxu0 %v775
          %794 = vmatprep.subr.bf16.mxu0 0
          %795 = vmatpush1.bf16.msra.mxu0 %v776
          %796 = vmatprep.subr.bf16.mxu0 0
          %797 = vmatpush1.bf16.msra.mxu0 %v777
          %798 = vmatprep.subr.bf16.mxu0 0
          %799 = vmatpush1.bf16.msra.mxu0 %v778
          %800 = vmatprep.subr.bf16.mxu0 0
          %801 = vmatpush1.bf16.msra.mxu0 %v779
          %802 = vmatprep.subr.bf16.mxu0 0
          %803 = vmatpush1.bf16.msra.mxu0 %v780
          %804 = vmatprep.subr.bf16.mxu0 0
          %805 = vmatpush1.bf16.msra.mxu0 %v781
          %806 = vmatprep.subr.bf16.mxu0 0
          %807 = vmatpush1.bf16.msra.mxu0 0
          %808 = vmatprep.subr.bf16.mxu0 0
          %809 = vmatpush1.bf16.msra.mxu0 0
          %810 = vmatprep.subr.bf16.mxu0 0
          %811 = vmatpush1.bf16.msra.mxu0 0
          %812 = vmatprep.subr.bf16.mxu0 0
          %813 = vmatpush1.bf16.msra.mxu0 0
          %814 = vmatprep.subr.bf16.mxu0 0
          %815 = vmatpush1.bf16.msra.mxu0 0
          %816 = vmatprep.subr.bf16.mxu0 0
          %817 = vmatpush1.bf16.msra.mxu0 0
          %818 = vmatprep.subr.bf16.mxu0 0
          %819 = vmatpush1.bf16.msra.mxu0 0
          %820 = vmatprep.subr.bf16.mxu0 0
          %821 = vmatpush1.bf16.msra.mxu0 0
          %822 = vmatprep.mubr.bf16.mxu0 0
          %823 = vmatmul.mubr.bf16.gmra.mrb[0].mxu0 %v718
          %v824 = vpop.f32.mrb[0].mxu0
          %v825 = vadd.f32 %v740, %v824
          %v826 = vpop.f32.mrb[0].mxu0
          %v827 = vpop.f32.mrb[0].mxu0
          %v828 = vpop.f32.mrb[0].mxu0
          %829 = vdwg.mxu0
          %v830 = vmax.f32 %v825, 0.0
          %831 = vst [vmem:[#allocation3] sm:$0xff] %v830
        $region84: #{nbeats_forward.1} parent=55 // pred_fallthru
          _
        %p832 = scmp.eq.s32.totalorder %s34, 2
        // Predicated region
        $region85: #{nbeats_forward.1} parent=55 // pred_check
          %p833 = pneg %p832
        $region86: #{nbeats_forward.1} parent=55 // pred_check_branch
          %835 = sbr.rel (%p833) target = $region88
        $region87: #{nbeats_forward.1} parent=55 // pred_region
          %v836 = vld [vmem:[#allocation3] sm:$0xff]
          %v837 = vpack.c.bf16 %v836, %v836
          %v838 = vld [vmem:[%s480] sm:$0xf]
          %v839 = vld [vmem:[%s480 + $0x4] sm:$0xf]
          %v840 = vld [vmem:[%s480 + $0x8] sm:$0xf]
          %v841 = vld [vmem:[%s480 + $0xc] sm:$0xf]
          %v842 = vld [vmem:[%s480 + $0x10] sm:$0xf]
          %v843 = vld [vmem:[%s480 + $0x14] sm:$0xf]
          %v844 = vld [vmem:[%s480 + $0x18] sm:$0xf]
          %v845 = vld [vmem:[%s480 + $0x1c] sm:$0xf]
          %v846 = vld [vmem:[%s480 + $0x20] sm:$0xf]
          %v847 = vld [vmem:[%s480 + $0x24] sm:$0xf]
          %v848 = vld [vmem:[%s480 + $0x28] sm:$0xf]
          %v849 = vld [vmem:[%s480 + $0x2c] sm:$0xf]
          %v850 = vld [vmem:[%s480 + $0x30] sm:$0xf]
          %v851 = vld [vmem:[%s480 + $0x34] sm:$0xf]
          %v852 = vld [vmem:[%s480 + $0x38] sm:$0xf]
          %v853 = vld [vmem:[%s480 + $0x3c] sm:$0xf]
          %v854 = vld [vmem:[%s577] sm:$0x1]
          %v856 = vlaneseq
          %v857 = vshrl.u32 %v856, 7
          %v858 = vsub.s32 0, %v857
          %v859 = vrot.slane %v854, %v858
          %v877 = vunpack.c.l.b16 %v838
          %v878 = vunpack.c.l.b16 %v839
          %v879 = vunpack.c.l.b16 %v840
          %v880 = vunpack.c.l.b16 %v841
          %v881 = vunpack.c.l.b16 %v842
          %v882 = vunpack.c.l.b16 %v843
          %v883 = vunpack.c.l.b16 %v844
          %v884 = vunpack.c.l.b16 %v845
          %v885 = vunpack.c.l.b16 %v846
          %v886 = vunpack.c.l.b16 %v847
          %v887 = vunpack.c.l.b16 %v848
          %v888 = vunpack.c.l.b16 %v849
          %v889 = vunpack.c.l.b16 %v850
          %v890 = vunpack.c.l.b16 %v851
          %v891 = vunpack.c.l.b16 %v852
          %v892 = vunpack.c.l.b16 %v853
          %v893 = vpack.c.b16 %v878, %v877
          %v894 = vpack.c.b16 %v880, %v879
          %v895 = vpack.c.b16 %v882, %v881
          %v896 = vpack.c.b16 %v884, %v883
          %v897 = vpack.c.b16 %v886, %v885
          %v898 = vpack.c.b16 %v888, %v887
          %v899 = vpack.c.b16 %v890, %v889
          %v900 = vpack.c.b16 %v892, %v891
          %909 = vmatprep.subr.bf16.mxu0 0
          %910 = vmatpush1.bf16.msra.mxu0 %v893
          %911 = vmatprep.subr.bf16.mxu0 0
          %912 = vmatpush1.bf16.msra.mxu0 %v894
          %913 = vmatprep.subr.bf16.mxu0 0
          %914 = vmatpush1.bf16.msra.mxu0 %v895
          %915 = vmatprep.subr.bf16.mxu0 0
          %916 = vmatpush1.bf16.msra.mxu0 %v896
          %917 = vmatprep.subr.bf16.mxu0 0
          %918 = vmatpush1.bf16.msra.mxu0 %v897
          %919 = vmatprep.subr.bf16.mxu0 0
          %920 = vmatpush1.bf16.msra.mxu0 %v898
          %921 = vmatprep.subr.bf16.mxu0 0
          %922 = vmatpush1.bf16.msra.mxu0 %v899
          %923 = vmatprep.subr.bf16.mxu0 0
          %924 = vmatpush1.bf16.msra.mxu0 %v900
          %925 = vmatprep.subr.bf16.mxu0 0
          %926 = vmatpush1.bf16.msra.mxu0 0
          %927 = vmatprep.subr.bf16.mxu0 0
          %928 = vmatpush1.bf16.msra.mxu0 0
          %929 = vmatprep.subr.bf16.mxu0 0
          %930 = vmatpush1.bf16.msra.mxu0 0
          %931 = vmatprep.subr.bf16.mxu0 0
          %932 = vmatpush1.bf16.msra.mxu0 0
          %933 = vmatprep.subr.bf16.mxu0 0
          %934 = vmatpush1.bf16.msra.mxu0 0
          %935 = vmatprep.subr.bf16.mxu0 0
          %936 = vmatpush1.bf16.msra.mxu0 0
          %937 = vmatprep.subr.bf16.mxu0 0
          %938 = vmatpush1.bf16.msra.mxu0 0
          %939 = vmatprep.subr.bf16.mxu0 0
          %940 = vmatpush1.bf16.msra.mxu0 0
          %941 = vmatprep.mubr.bf16.mxu0 0
          %942 = vmatmul.mubr.bf16.gmra.mrb[0].mxu0 %v837
          %v943 = vpop.f32.mrb[0].mxu0
          %v944 = vadd.f32 %v859, %v943
          %v945 = vpop.f32.mrb[0].mxu0
          %v946 = vpop.f32.mrb[0].mxu0
          %v947 = vpop.f32.mrb[0].mxu0
          %948 = vdwg.mxu0
          %v949 = vld [vmem:[#allocation2] sm:$0xff]
          %v950 = vsub.f32 %v949, %v944
          %951 = vst [vmem:[#allocation2] sm:$0xff] %v950
          %v952 = vld [vmem:[%s580] sm:$0x1]
          %v954 = vlaneseq
          %v955 = vshrl.u32 %v954, 7
          %v956 = vsub.s32 0, %v955
          %v957 = vrot.slane %v952, %v956
          %v959 = vmul.f32 %v836, %v957
          %960 = vadd.xlane.f32.xlu0 %v959
          %v961 = vpop.xlane.xlu0 %960
          %s962 = sld [smem:[#allocation10 + %s33]]
          %v963 = vstv %s962
          %v964 = vadd.f32 %v961, %v963
          %v965 = vld [vmem:[%s584] sm:$0xff]
          %v966 = vadd.f32 %v965, %v964
          %967 = vst [vmem:[%s584] sm:$0xff] %v966
        $region88: #{nbeats_forward.1} parent=55 // pred_fallthru
          _
        %p968 = scmp.lt.s32.totalorder %s32, 0
        %s969 = scalar_select %p968, %s32, 0
        %s970 = smul.addr %s969, 8
        %s971 = scalar_lea.vmem %s9, %s970
        // Predicated region
        $region89: #{nbeats_forward.1} parent=55 // pred_check
          %p972 = pneg %p309
        $region90: #{nbeats_forward.1} parent=55 // pred_check_branch
          %974 = sbr.rel (%p972) target = $region92
        $region91: #{nbeats_forward.1} parent=55 // pred_region
          _
        $region92: #{nbeats_forward.1} parent=55 // pred_fallthru
          _
        // Predicated region
        $region93: #{nbeats_forward.1} parent=55 // pred_check
          %p975 = pneg %p309
        $region94: #{nbeats_forward.1} parent=55 // pred_check_branch
          %977 = sbr.rel (%p975) target = $region96
        $region95: #{nbeats_forward.1} parent=55 // pred_region
          %p978 = scmp.lt.s32.totalorder %s32, 0
          %s979 = scalar_select %p978, %s32, 0
          %s980 = smul.addr %s979, 8
          %s981 = scalar_lea.vmem %s9, %s980
        $region96: #{nbeats_forward.1} parent=55 // pred_fallthru
          _
      $region56: #{nbeats_forward.1} parent=5 // pred_fallthru
        _
      %p982 = scmp.le.s32.totalorder 2, %s22
      // Predicated region
      $region97: #{nbeats_forward.1} parent=5 // pred_check
        %p983 = pneg %p982
      $region98: #{nbeats_forward.1} parent=5 // pred_check_branch
        %985 = sbr.rel (%p983) target = $region100
      $region99: #{nbeats_forward.1} parent=5 // pred_region
        %s986 = ssub.s32 %s22, 2
      $region100: #{nbeats_forward.1} parent=5 // pred_fallthru
        _
    $region6: #{nbeats_forward.1} parent=1 // loop_footer
      %s26 = sadd.s32 1, %s22
    $region7: #{nbeats_forward.1} parent=1 // loop_footer_branch
      %21 = sbr.rel target = $region3
    $region8: #{nbeats_forward.1} parent=1 // loop_exit
      _
    %987 = vsyncpa [#allocation5], 1
    %s988 = scalar_lea.sflag [#allocation5], 1
    %989 = vsyncpa %s988, 1
    %990 = vsyncpa [#allocation8], 1
    %s991 = scalar_lea.sflag [#allocation8], 1
    %992 = vsyncpa %s991, 1
    %993 = vsyncpa [#allocation6], 1
    %s994 = scalar_lea.sflag [#allocation6], 1
    %995 = vsyncpa %s994, 1

</llo_original>
